<compile_context>
chip_gen: v7x
topology: tpu7x:2x2x1
jax: 0.10.0
libtpu: 0.0.40
codegen_flags: <defaults>
</compile_context>

<pallas_src>
import functools

import jax
import jax.numpy as jnp
from jax.experimental import pallas as pl
from jax.experimental.pallas import tpu as pltpu

# ----------------------------- configuration --------------------------------
HIDDEN = 64                            # hidden_size
PATCH = 2                              # patch_size
OUT_CHANNELS = 3                       # out_channels
N_OUT = PATCH * PATCH * OUT_CHANNELS   # 12  (true projection width)
N_PAD = 128                            # lane-dense padded projection width
COND = min(HIDDEN, 1024)               # conditioning dim of adaLN_modulation input
BATCH = 2
SEQ = 256                              # (32 // 2)**2 tokens
EPS = 1e-6                             # norm_final eps
MXU_DTYPE = jnp.bfloat16               # matmul-operand dtype (f32 accumulation)


# ----------------------------- Pallas kernel --------------------------------
def _final_layer_kernel(x_ref, c_ref,
                        aws_ref, awc_ref, abs_ref, abc_ref,
                        w_ref, b_ref, o_ref, *, eps):
    """Fused adaLN-modulation + LayerNorm(no affine) + modulate + projection.

    Block shapes (one grid step = one batch element):
      x_ref   : (1, S, D)     f32   tokens
      c_ref   : (1, 1, COND)  f32   conditioning vector
      aws_ref : (COND, D)     bf16  adaLN weight, shift half
      awc_ref : (COND, D)     bf16  adaLN weight, scale half
      abs_ref : (1, D)        f32   adaLN bias, shift half
      abc_ref : (1, D)        f32   adaLN bias, scale half
      w_ref   : (D, N_PAD)    bf16  final projection weight (zero-padded cols)
      b_ref   : (1, N_PAD)    f32   final projection bias  (zero-padded)
      o_ref   : (1, S, N_PAD) f32
    """
    # --- adaLN_modulation: shift/scale = Linear(SiLU(c)) ---------------------
    c = c_ref[0]                                   # (1, COND) f32
    c = c * jax.nn.sigmoid(c)                      # SiLU in f32 (EUP + VPU)
    cm = c.astype(aws_ref.dtype)                   # bf16 MXU operand
    shift = jnp.dot(cm, aws_ref[...],
                    preferred_element_type=jnp.float32) + abs_ref[...]   # (1, D)
    scale = jnp.dot(cm, awc_ref[...],
                    preferred_element_type=jnp.float32) + abc_ref[...]   # (1, D)

    # --- LayerNorm (elementwise_affine=False) + modulate ----------------------
    x = x_ref[0]                                   # (S, D) f32
    mean = jnp.mean(x, axis=-1, keepdims=True)
    var = jnp.mean(jnp.square(x - mean), axis=-1, keepdims=True)
    xn = (x - mean) * jax.lax.rsqrt(var + eps)     # no gamma/beta work
    y = xn * (1.0 + scale) + shift                 # broadcast (1,D) over (S,D)

    # --- final projection (lane-dense N_PAD output) --------------------------
    out = jnp.dot(y.astype(w_ref.dtype), w_ref[...],
                  preferred_element_type=jnp.float32) + b_ref[...]
    o_ref[...] = out[None]                         # (1, S, N_PAD), full-lane stores


def final_layer_forward(params, x, c):
    """x: (B, S, HIDDEN) f32, c: (B, COND) f32 -> (B, S, N_OUT) f32."""
    B, S, D = x.shape
    cond = c.shape[1]
    c3 = c.reshape(B, 1, cond).astype(jnp.float32)

    out_pad = pl.pallas_call(
        functools.partial(_final_layer_kernel, eps=EPS),
        out_shape=jax.ShapeDtypeStruct((B, S, N_PAD), jnp.float32),
        grid=(B,),
        in_specs=[
            pl.BlockSpec((1, S, D), lambda i: (i, 0, 0)),        # x
            pl.BlockSpec((1, 1, cond), lambda i: (i, 0, 0)),     # c
            pl.BlockSpec((cond, D), lambda i: (0, 0)),           # ada W (shift)
            pl.BlockSpec((cond, D), lambda i: (0, 0)),           # ada W (scale)
            pl.BlockSpec((1, D), lambda i: (0, 0)),              # ada b (shift)
            pl.BlockSpec((1, D), lambda i: (0, 0)),              # ada b (scale)
            pl.BlockSpec((D, N_PAD), lambda i: (0, 0)),          # projection W (padded)
            pl.BlockSpec((1, N_PAD), lambda i: (0, 0)),          # projection b (padded)
        ],
        out_specs=pl.BlockSpec((1, S, N_PAD), lambda i: (i, 0, 0)),
        compiler_params=pltpu.CompilerParams(
            dimension_semantics=("parallel",)),                  # batch across TCs
    )(x.astype(jnp.float32), c3,
      params['ada_w_shift'], params['ada_w_scale'],
      params['ada_b_shift'], params['ada_b_scale'],
      params['lin_w_pad'], params['lin_b_pad'])

    return out_pad[:, :, :N_OUT]     # drop the zero-padded lanes (cheap XLA slice)


# ----------------------------- parameters -----------------------------------
def init_raw_params(key):
    """PyTorch-layout parameters (f32), matching FinalLayer.__init__."""
    k1, k2, k3, k4 = jax.random.split(key, 4)
    nrm = lambda k, shape: 0.02 * jax.random.normal(k, shape, jnp.float32)
    return {
        'ada_w': nrm(k1, (COND, 2 * HIDDEN)),   # adaLN_modulation[1].weight^T
        'ada_b': nrm(k2, (2 * HIDDEN,)),        # adaLN_modulation[1].bias
        # NOTE: the reference zero-inits self.linear (weight & bias). We use
        # small random values so the projection path is actually exercised;
        # forward semantics are identical for any weight values.
        'lin_w': nrm(k3, (HIDDEN, N_OUT)),
        'lin_b': nrm(k4, (N_OUT,)),
    }


def prepare_kernel_params(raw):
    """Split/pad/cast PyTorch-layout params into the fused-kernel layout."""
    ada_w = raw['ada_w']
    ada_b = raw['ada_b']
    lin_w_pad = jnp.zeros((HIDDEN, N_PAD), jnp.float32).at[:, :N_OUT].set(raw['lin_w'])
    lin_b_pad = jnp.zeros((1, N_PAD), jnp.float32).at[0, :N_OUT].set(raw['lin_b'])
    return {
        'ada_w_shift': ada_w[:, :HIDDEN].astype(MXU_DTYPE),      # chunk(2, dim=1)[0]
        'ada_w_scale': ada_w[:, HIDDEN:].astype(MXU_DTYPE),      # chunk(2, dim=1)[1]
        'ada_b_shift': ada_b[:HIDDEN].reshape(1, HIDDEN).astype(jnp.float32),
        'ada_b_scale': ada_b[HIDDEN:].reshape(1, HIDDEN).astype(jnp.float32),
        'lin_w_pad': lin_w_pad.astype(MXU_DTYPE),
        'lin_b_pad': lin_b_pad,
    }


# ----------------------------- pure-JAX reference ----------------------------
def final_layer_ref(raw, x, c):
    cc = jax.nn.silu(c)
    mod = cc @ raw['ada_w'] + raw['ada_b']                       # (B, 2D)
    shift, scale = jnp.split(mod, 2, axis=1)
    mean = jnp.mean(x, axis=-1, keepdims=True)
    var = jnp.mean(jnp.square(x - mean), axis=-1, keepdims=True)
    xn = (x - mean) / jnp.sqrt(var + EPS)
    y = xn * (1.0 + scale[:, None, :]) + shift[:, None, :]
    return y @ raw['lin_w'] + raw['lin_b']


# ----------------------------- main ------------------------------------------
if __name__ == "__main__":
    key = jax.random.PRNGKey(0)
    pkey, xkey, ckey = jax.random.split(key, 3)

    raw = init_raw_params(pkey)
    params = prepare_kernel_params(raw)

    x = jax.random.normal(xkey, (BATCH, SEQ, HIDDEN), jnp.float32)
    c = jax.random.normal(ckey, (BATCH, COND), jnp.float32)

    fwd = jax.jit(final_layer_forward)
    out = fwd(params, x, c)
    jax.block_until_ready(out)

    assert out.shape == (BATCH, SEQ, N_OUT), out.shape
    assert bool(jnp.all(jnp.isfinite(out)))

    # Correctness vs. f32 reference (kernel uses bf16 MXU operands -> loose tol).
    ref = final_layer_ref(raw, x, c)
    max_err = float(jnp.max(jnp.abs(out - ref)))
    assert max_err < 5e-2, f"max abs err {max_err}"

    print("KERNEL_OK")
</pallas_src>

<mosaic_0001>
module attributes {stable_mosaic.version = 11 : i64} {
  func.func @_final_layer_kernel(%arg0: i32, %arg1: memref<1x256x64xf32, #tpu.memory_space<vmem>>, %arg2: memref<1x1x64xf32, #tpu.memory_space<vmem>>, %arg3: memref<64x64xbf16, #tpu.memory_space<vmem>>, %arg4: memref<64x64xbf16, #tpu.memory_space<vmem>>, %arg5: memref<1x64xf32, #tpu.memory_space<vmem>>, %arg6: memref<1x64xf32, #tpu.memory_space<vmem>>, %arg7: memref<64x128xbf16, #tpu.memory_space<vmem>>, %arg8: memref<1x128xf32, #tpu.memory_space<vmem>>, %arg9: memref<1x256x128xf32, #tpu.memory_space<vmem>>) attributes {dimension_semantics = [#tpu.dimension_semantics<parallel>], iteration_bounds = array<i64: 2>, scalar_prefetch = 0 : i64, scratch_operands = 0 : i64, tpu.core_type = #tpu.core_type<tc>, window_params = [{transform_indices = @transform_0, window_bounds = array<i64: 1, 256, 64>}, {transform_indices = @transform_1, window_bounds = array<i64: 1, 1, 64>}, {pipeline_mode = #tpu.pipeline_mode<synchronous>, transform_indices = @transform_2, window_bounds = array<i64: 64, 64>}, {pipeline_mode = #tpu.pipeline_mode<synchronous>, transform_indices = @transform_3, window_bounds = array<i64: 64, 64>}, {pipeline_mode = #tpu.pipeline_mode<synchronous>, transform_indices = @transform_4, window_bounds = array<i64: 1, 64>}, {pipeline_mode = #tpu.pipeline_mode<synchronous>, transform_indices = @transform_5, window_bounds = array<i64: 1, 64>}, {pipeline_mode = #tpu.pipeline_mode<synchronous>, transform_indices = @transform_6, window_bounds = array<i64: 64, 128>}, {pipeline_mode = #tpu.pipeline_mode<synchronous>, transform_indices = @transform_7, window_bounds = array<i64: 1, 128>}, {transform_indices = @transform_8, window_bounds = array<i64: 1, 256, 128>}]} {
    %c0 = arith.constant 0 : index
    %c0_0 = arith.constant 0 : index
    %c0_1 = arith.constant 0 : index
    %0 = vector.load %arg2[%c0, %c0_0, %c0_1] : memref<1x1x64xf32, #tpu.memory_space<vmem>>, vector<1x1x64xf32>
    %1 = vector.shape_cast %0 : vector<1x1x64xf32> to vector<1x64xf32>
    %2 = arith.negf %1 : vector<1x64xf32>
    %3 = math.exp %2 : vector<1x64xf32>
    %cst = arith.constant 1.000000e+00 : f32
    %4 = vector.broadcast %cst : f32 to vector<1x64xf32>
    %5 = arith.addf %4, %3 : vector<1x64xf32>
    %6 = arith.divf %4, %5 : vector<1x64xf32>
    %7 = arith.mulf %1, %6 : vector<1x64xf32>
    %8 = arith.truncf %7 : vector<1x64xf32> to vector<1x64xbf16>
    %c0_2 = arith.constant 0 : index
    %c0_3 = arith.constant 0 : index
    %9 = vector.load %arg3[%c0_2, %c0_3] : memref<64x64xbf16, #tpu.memory_space<vmem>>, vector<64x64xbf16>
    %cst_4 = arith.constant dense<0.000000e+00> : vector<1x64xf32>
    %10 = tpu.matmul %8, %9, %cst_4 {dimension_numbers = #tpu.dot_dimension_numbers<[1], [0], [0], [1], [0, 0, 1, 1], [], []>} : vector<1x64xbf16>, vector<64x64xbf16>, vector<1x64xf32> -> vector<1x64xf32>
    %c0_5 = arith.constant 0 : index
    %c0_6 = arith.constant 0 : index
    %11 = vector.load %arg5[%c0_5, %c0_6] : memref<1x64xf32, #tpu.memory_space<vmem>>, vector<1x64xf32>
    %12 = arith.addf %10, %11 : vector<1x64xf32>
    %c0_7 = arith.constant 0 : index
    %c0_8 = arith.constant 0 : index
    %13 = vector.load %arg4[%c0_7, %c0_8] : memref<64x64xbf16, #tpu.memory_space<vmem>>, vector<64x64xbf16>
    %cst_9 = arith.constant dense<0.000000e+00> : vector<1x64xf32>
    %14 = tpu.matmul %8, %13, %cst_9 {dimension_numbers = #tpu.dot_dimension_numbers<[1], [0], [0], [1], [0, 0, 1, 1], [], []>} : vector<1x64xbf16>, vector<64x64xbf16>, vector<1x64xf32> -> vector<1x64xf32>
    %c0_10 = arith.constant 0 : index
    %c0_11 = arith.constant 0 : index
    %15 = vector.load %arg6[%c0_10, %c0_11] : memref<1x64xf32, #tpu.memory_space<vmem>>, vector<1x64xf32>
    %16 = arith.addf %14, %15 : vector<1x64xf32>
    %c0_12 = arith.constant 0 : index
    %c0_13 = arith.constant 0 : index
    %c0_14 = arith.constant 0 : index
    %17 = vector.load %arg1[%c0_12, %c0_13, %c0_14] : memref<1x256x64xf32, #tpu.memory_space<vmem>>, vector<1x256x64xf32>
    %18 = vector.shape_cast %17 : vector<1x256x64xf32> to vector<256x64xf32>
    %cst_15 = arith.constant dense<0.000000e+00> : vector<256xf32>
    %19 = vector.multi_reduction <add>, %18, %cst_15 [1] : vector<256x64xf32> to vector<256xf32>
    %20 = vector.shape_cast %19 : vector<256xf32> to vector<256x1xf32>
    %cst_16 = arith.constant 6.400000e+01 : f32
    %21 = vector.broadcast %cst_16 : f32 to vector<256x1xf32>
    %22 = arith.divf %20, %21 : vector<256x1xf32>
    %23 = vector.broadcast %22 : vector<256x1xf32> to vector<256x64xf32>
    %24 = arith.subf %18, %23 : vector<256x64xf32>
    %25 = arith.mulf %24, %24 : vector<256x64xf32>
    %cst_17 = arith.constant dense<0.000000e+00> : vector<256xf32>
    %26 = vector.multi_reduction <add>, %25, %cst_17 [1] : vector<256x64xf32> to vector<256xf32>
    %27 = vector.shape_cast %26 : vector<256xf32> to vector<256x1xf32>
    %cst_18 = arith.constant 6.400000e+01 : f32
    %28 = vector.broadcast %cst_18 : f32 to vector<256x1xf32>
    %29 = arith.divf %27, %28 : vector<256x1xf32>
    %30 = vector.broadcast %22 : vector<256x1xf32> to vector<256x64xf32>
    %31 = arith.subf %18, %30 : vector<256x64xf32>
    %cst_19 = arith.constant 9.99999997E-7 : f32
    %32 = vector.broadcast %cst_19 : f32 to vector<256x1xf32>
    %33 = arith.addf %29, %32 : vector<256x1xf32>
    %34 = math.rsqrt %33 : vector<256x1xf32>
    %35 = vector.broadcast %34 : vector<256x1xf32> to vector<256x64xf32>
    %36 = arith.mulf %31, %35 : vector<256x64xf32>
    %cst_20 = arith.constant 1.000000e+00 : f32
    %37 = vector.broadcast %cst_20 : f32 to vector<1x64xf32>
    %38 = arith.addf %37, %16 : vector<1x64xf32>
    %39 = vector.broadcast %38 : vector<1x64xf32> to vector<256x64xf32>
    %40 = arith.mulf %36, %39 : vector<256x64xf32>
    %41 = vector.broadcast %12 : vector<1x64xf32> to vector<256x64xf32>
    %42 = arith.addf %40, %41 : vector<256x64xf32>
    %43 = arith.truncf %42 : vector<256x64xf32> to vector<256x64xbf16>
    %c0_21 = arith.constant 0 : index
    %c0_22 = arith.constant 0 : index
    %44 = vector.load %arg7[%c0_21, %c0_22] : memref<64x128xbf16, #tpu.memory_space<vmem>>, vector<64x128xbf16>
    %cst_23 = arith.constant dense<0.000000e+00> : vector<256x128xf32>
    %45 = tpu.matmul %43, %44, %cst_23 {dimension_numbers = #tpu.dot_dimension_numbers<[1], [0], [0], [1], [0, 0, 1, 1], [], []>} : vector<256x64xbf16>, vector<64x128xbf16>, vector<256x128xf32> -> vector<256x128xf32>
    %c0_24 = arith.constant 0 : index
    %c0_25 = arith.constant 0 : index
    %46 = vector.load %arg8[%c0_24, %c0_25] : memref<1x128xf32, #tpu.memory_space<vmem>>, vector<1x128xf32>
    %47 = vector.broadcast %46 : vector<1x128xf32> to vector<256x128xf32>
    %48 = arith.addf %45, %47 : vector<256x128xf32>
    %49 = vector.shape_cast %48 : vector<256x128xf32> to vector<1x256x128xf32>
    %c0_26 = arith.constant 0 : index
    %c0_27 = arith.constant 0 : index
    %c0_28 = arith.constant 0 : index
    %50 = vector.load %arg9[%c0_26, %c0_27, %c0_28] : memref<1x256x128xf32, #tpu.memory_space<vmem>>, vector<1x256x128xf32>
    tpu.vector_store %arg9[%c0_26, %c0_27, %c0_28], %49 {strides = array<i32>} : memref<1x256x128xf32, #tpu.memory_space<vmem>>, vector<1x256x128xf32>,
    return
  }
  func.func @transform_0(%arg0: i32) -> (i32, i32, i32) {
    %c0_i32 = arith.constant 0 : i32
    %c0_i32_0 = arith.constant 0 : i32
    %c0_i32_1 = arith.constant 0 : i32
    return %arg0, %c0_i32, %c0_i32_0 : i32, i32, i32
  }
  func.func @transform_1(%arg0: i32) -> (i32, i32, i32) {
    %c0_i32 = arith.constant 0 : i32
    %c0_i32_0 = arith.constant 0 : i32
    %c0_i32_1 = arith.constant 0 : i32
    return %arg0, %c0_i32, %c0_i32_0 : i32, i32, i32
  }
  func.func @transform_2(%arg0: i32) -> (i32, i32) {
    %c0_i32 = arith.constant 0 : i32
    %c0_i32_0 = arith.constant 0 : i32
    %c0_i32_1 = arith.constant 0 : i32
    return %c0_i32, %c0_i32_0 : i32, i32
  }
  func.func @transform_3(%arg0: i32) -> (i32, i32) {
    %c0_i32 = arith.constant 0 : i32
    %c0_i32_0 = arith.constant 0 : i32
    %c0_i32_1 = arith.constant 0 : i32
    return %c0_i32, %c0_i32_0 : i32, i32
  }
  func.func @transform_4(%arg0: i32) -> (i32, i32) {
    %c0_i32 = arith.constant 0 : i32
    %c0_i32_0 = arith.constant 0 : i32
    %c0_i32_1 = arith.constant 0 : i32
    return %c0_i32, %c0_i32_0 : i32, i32
  }
  func.func @transform_5(%arg0: i32) -> (i32, i32) {
    %c0_i32 = arith.constant 0 : i32
    %c0_i32_0 = arith.constant 0 : i32
    %c0_i32_1 = arith.constant 0 : i32
    return %c0_i32, %c0_i32_0 : i32, i32
  }
  func.func @transform_6(%arg0: i32) -> (i32, i32) {
    %c0_i32 = arith.constant 0 : i32
    %c0_i32_0 = arith.constant 0 : i32
    %c0_i32_1 = arith.constant 0 : i32
    return %c0_i32, %c0_i32_0 : i32, i32
  }
  func.func @transform_7(%arg0: i32) -> (i32, i32) {
    %c0_i32 = arith.constant 0 : i32
    %c0_i32_0 = arith.constant 0 : i32
    %c0_i32_1 = arith.constant 0 : i32
    return %c0_i32, %c0_i32_0 : i32, i32
  }
  func.func @transform_8(%arg0: i32) -> (i32, i32, i32) {
    %c0_i32 = arith.constant 0 : i32
    %c0_i32_0 = arith.constant 0 : i32
    %c0_i32_1 = arith.constant 0 : i32
    return %arg0, %c0_i32, %c0_i32_0 : i32, i32, i32
  }
}

</mosaic_0001>

<llo_original>
// kernel: final_layer_forward.1
$region0: #{final_layer_forward.1}
  #allocation0 [shape = 'u32[]', space=smem, size = 0x4, offset = 0x4, fixed_abs, tag = 'smem constant byte address 0x4 - core index']
  #allocation1 [shape = 'u32[144,128]{1,0:T(1,128)}', space=vmem, size = 0x12000, scoped, tag = 'internal scratch']
  %s0 = inlined_call_operand.vmem [shape: f32[2,256,64], index: 0, kind: input, shape index: {}]
  %s1 = inlined_call_operand.vmem [shape: f32[2,1,64], index: 1, kind: input, shape index: {}]
  %s2 = inlined_call_operand.vmem [shape: bf16[64,64], index: 2, kind: input, shape index: {}]
  %s3 = inlined_call_operand.vmem [shape: bf16[64,64], index: 3, kind: input, shape index: {}]
  %s4 = inlined_call_operand.vmem [shape: f32[1,64], index: 4, kind: input, shape index: {}]
  %s5 = inlined_call_operand.vmem [shape: f32[1,64], index: 5, kind: input, shape index: {}]
  %s6 = inlined_call_operand.vmem [shape: bf16[64,128], index: 6, kind: input, shape index: {}]
  %s7 = inlined_call_operand.vmem [shape: f32[1,128], index: 7, kind: input, shape index: {}]
  %s8 = inlined_call_operand.vmem [shape: f32[2,256,128], index: 8, kind: output, shape index: {}]
  %s9 = sld [smem:[#allocation0]]
  $region65: #{final_layer_forward.1} parent=0
    _
  %s11 = ssub.s32 1, %s9
  %s12 = scalar_select 0, %s11, %s9
  loop: start=0, step=1, limit=4
  $region2: #{final_layer_forward.1} parent=0 // loop_pre_header
    _
  $region3: #{final_layer_forward.1} parent=0 // loop_header
    %s14 = sphi 0, %s18
    %p15 = scmp.ge.s32.totalorder %s14, 4
    %s24 = sphi 0, %s26
    %s27 = sphi 0, %s24
    %s28 = sphi 0, %s27
    %s44 = sphi 0, %s28
    %s50 = sphi 0, %s52
    %s53 = sphi 0, %s50
    %s54 = sphi 0, %s53
    %s70 = sphi 0, %s54
    %s74 = sphi 0, %s74
    %s76 = sphi 0, %s74
    %s77 = sphi 0, %s76
    %s91 = sphi 0, %s77
    %s95 = sphi 0, %s95
    %s97 = sphi 0, %s95
    %s98 = sphi 0, %s97
    %s112 = sphi 0, %s98
    %s116 = sphi 0, %s116
    %s118 = sphi 0, %s116
    %s119 = sphi 0, %s118
    %s133 = sphi 0, %s119
    %s137 = sphi 0, %s137
    %s139 = sphi 0, %s137
    %s140 = sphi 0, %s139
    %s154 = sphi 0, %s140
    %s158 = sphi 0, %s158
    %s160 = sphi 0, %s158
    %s161 = sphi 0, %s160
    %s175 = sphi 0, %s161
    %s179 = sphi 0, %s179
    %s181 = sphi 0, %s179
    %s182 = sphi 0, %s181
    %s196 = sphi 0, %s182
    %s202 = sphi 0, %s204
    %s205 = sphi 0, %s202
    %s206 = sphi 0, %s205
    %s222 = sphi 0, %s206
  $region4: #{final_layer_forward.1} parent=0 // loop_header_branch
    %17 = sbr.rel (%p15) target = $region8
  $region5: #{final_layer_forward.1} parent=0 // loop_body
    %s19 = ssub.s32 %s14, 1
    %s20 = ssub.s32 %s14, 2
    %s21 = sadd.s32 %s14, 1
    %s22 = ssub.s32 %s14, %s21
    %p23 = scmp.eq.s32.totalorder %s22, 0
    %s25 = sadd.s32 %s24, 1
    %s26 = scalar_select %p23, %s24, %s25
    %p29 = pneg %p23
    %p30 = scmp.eq.s32.totalorder %s14, 1
    %p31 = por %p29, %p30
    %p32 = scmp.ne.s32.totalorder %s24, %s27
    %p33 = scmp.eq.s32.totalorder %s14, 0
    %p34 = por %p32, %p33
    %p35 = scmp.ne.s32.totalorder %s24, %s27
    %p36 = scmp.eq.s32.totalorder %s19, 1
    %p37 = por %p35, %p36
    %p38 = scmp.ne.s32.totalorder %s27, %s28
    %p39 = scmp.eq.s32.totalorder %s19, 0
    %p40 = por %p38, %p39
    %p41 = scmp.ne.s32.totalorder %s27, %s28
    %p42 = scmp.eq.s32.totalorder %s20, 1
    %p43 = por %p41, %p42
    %p45 = scmp.ne.s32.totalorder %s28, %s44
    %p46 = scmp.eq.s32.totalorder %s20, 0
    %p47 = por %p45, %p46
    %s48 = ssub.s32 %s14, %s21
    %p49 = scmp.eq.s32.totalorder %s48, 0
    %s51 = sadd.s32 %s50, 1
    %s52 = scalar_select %p49, %s50, %s51
    %p55 = pneg %p49
    %p56 = scmp.eq.s32.totalorder %s14, 1
    %p57 = por %p55, %p56
    %p58 = scmp.ne.s32.totalorder %s50, %s53
    %p59 = scmp.eq.s32.totalorder %s14, 0
    %p60 = por %p58, %p59
    %p61 = scmp.ne.s32.totalorder %s50, %s53
    %p62 = scmp.eq.s32.totalorder %s19, 1
    %p63 = por %p61, %p62
    %p64 = scmp.ne.s32.totalorder %s53, %s54
    %p65 = scmp.eq.s32.totalorder %s19, 0
    %p66 = por %p64, %p65
    %p67 = scmp.ne.s32.totalorder %s53, %s54
    %p68 = scmp.eq.s32.totalorder %s20, 1
    %p69 = por %p67, %p68
    %p71 = scmp.ne.s32.totalorder %s54, %s70
    %p72 = scmp.eq.s32.totalorder %s20, 0
    %p73 = por %p71, %p72
    %s75 = sadd.s32 %s74, 1
    %p78 = scmp.eq.s32.totalorder %s14, 1
    %p79 = scmp.ne.s32.totalorder %s74, %s76
    %p80 = scmp.eq.s32.totalorder %s14, 0
    %p81 = por %p79, %p80
    %p82 = scmp.ne.s32.totalorder %s74, %s76
    %p83 = scmp.eq.s32.totalorder %s19, 1
    %p84 = por %p82, %p83
    %p85 = scmp.ne.s32.totalorder %s76, %s77
    %p86 = scmp.eq.s32.totalorder %s19, 0
    %p87 = por %p85, %p86
    %p88 = scmp.ne.s32.totalorder %s76, %s77
    %p89 = scmp.eq.s32.totalorder %s20, 1
    %p90 = por %p88, %p89
    %p92 = scmp.ne.s32.totalorder %s77, %s91
    %p93 = scmp.eq.s32.totalorder %s20, 0
    %p94 = por %p92, %p93
    %s96 = sadd.s32 %s95, 1
    %p99 = scmp.eq.s32.totalorder %s14, 1
    %p100 = scmp.ne.s32.totalorder %s95, %s97
    %p101 = scmp.eq.s32.totalorder %s14, 0
    %p102 = por %p100, %p101
    %p103 = scmp.ne.s32.totalorder %s95, %s97
    %p104 = scmp.eq.s32.totalorder %s19, 1
    %p105 = por %p103, %p104
    %p106 = scmp.ne.s32.totalorder %s97, %s98
    %p107 = scmp.eq.s32.totalorder %s19, 0
    %p108 = por %p106, %p107
    %p109 = scmp.ne.s32.totalorder %s97, %s98
    %p110 = scmp.eq.s32.totalorder %s20, 1
    %p111 = por %p109, %p110
    %p113 = scmp.ne.s32.totalorder %s98, %s112
    %p114 = scmp.eq.s32.totalorder %s20, 0
    %p115 = por %p113, %p114
    %s117 = sadd.s32 %s116, 1
    %p120 = scmp.eq.s32.totalorder %s14, 1
    %p121 = scmp.ne.s32.totalorder %s116, %s118
    %p122 = scmp.eq.s32.totalorder %s14, 0
    %p123 = por %p121, %p122
    %p124 = scmp.ne.s32.totalorder %s116, %s118
    %p125 = scmp.eq.s32.totalorder %s19, 1
    %p126 = por %p124, %p125
    %p127 = scmp.ne.s32.totalorder %s118, %s119
    %p128 = scmp.eq.s32.totalorder %s19, 0
    %p129 = por %p127, %p128
    %p130 = scmp.ne.s32.totalorder %s118, %s119
    %p131 = scmp.eq.s32.totalorder %s20, 1
    %p132 = por %p130, %p131
    %p134 = scmp.ne.s32.totalorder %s119, %s133
    %p135 = scmp.eq.s32.totalorder %s20, 0
    %p136 = por %p134, %p135
    %s138 = sadd.s32 %s137, 1
    %p141 = scmp.eq.s32.totalorder %s14, 1
    %p142 = scmp.ne.s32.totalorder %s137, %s139
    %p143 = scmp.eq.s32.totalorder %s14, 0
    %p144 = por %p142, %p143
    %p145 = scmp.ne.s32.totalorder %s137, %s139
    %p146 = scmp.eq.s32.totalorder %s19, 1
    %p147 = por %p145, %p146
    %p148 = scmp.ne.s32.totalorder %s139, %s140
    %p149 = scmp.eq.s32.totalorder %s19, 0
    %p150 = por %p148, %p149
    %p151 = scmp.ne.s32.totalorder %s139, %s140
    %p152 = scmp.eq.s32.totalorder %s20, 1
    %p153 = por %p151, %p152
    %p155 = scmp.ne.s32.totalorder %s140, %s154
    %p156 = scmp.eq.s32.totalorder %s20, 0
    %p157 = por %p155, %p156
    %s159 = sadd.s32 %s158, 1
    %p162 = scmp.eq.s32.totalorder %s14, 1
    %p163 = scmp.ne.s32.totalorder %s158, %s160
    %p164 = scmp.eq.s32.totalorder %s14, 0
    %p165 = por %p163, %p164
    %p166 = scmp.ne.s32.totalorder %s158, %s160
    %p167 = scmp.eq.s32.totalorder %s19, 1
    %p168 = por %p166, %p167
    %p169 = scmp.ne.s32.totalorder %s160, %s161
    %p170 = scmp.eq.s32.totalorder %s19, 0
    %p171 = por %p169, %p170
    %p172 = scmp.ne.s32.totalorder %s160, %s161
    %p173 = scmp.eq.s32.totalorder %s20, 1
    %p174 = por %p172, %p173
    %p176 = scmp.ne.s32.totalorder %s161, %s175
    %p177 = scmp.eq.s32.totalorder %s20, 0
    %p178 = por %p176, %p177
    %s180 = sadd.s32 %s179, 1
    %p183 = scmp.eq.s32.totalorder %s14, 1
    %p184 = scmp.ne.s32.totalorder %s179, %s181
    %p185 = scmp.eq.s32.totalorder %s14, 0
    %p186 = por %p184, %p185
    %p187 = scmp.ne.s32.totalorder %s179, %s181
    %p188 = scmp.eq.s32.totalorder %s19, 1
    %p189 = por %p187, %p188
    %p190 = scmp.ne.s32.totalorder %s181, %s182
    %p191 = scmp.eq.s32.totalorder %s19, 0
    %p192 = por %p190, %p191
    %p193 = scmp.ne.s32.totalorder %s181, %s182
    %p194 = scmp.eq.s32.totalorder %s20, 1
    %p195 = por %p193, %p194
    %p197 = scmp.ne.s32.totalorder %s182, %s196
    %p198 = scmp.eq.s32.totalorder %s20, 0
    %p199 = por %p197, %p198
    %s200 = ssub.s32 %s14, %s21
    %p201 = scmp.eq.s32.totalorder %s200, 0
    %s203 = sadd.s32 %s202, 1
    %s204 = scalar_select %p201, %s202, %s203
    %p207 = pneg %p201
    %p208 = scmp.eq.s32.totalorder %s14, 1
    %p209 = por %p207, %p208
    %p210 = scmp.ne.s32.totalorder %s202, %s205
    %p211 = scmp.eq.s32.totalorder %s14, 0
    %p212 = por %p210, %p211
    %p213 = scmp.ne.s32.totalorder %s202, %s205
    %p214 = scmp.eq.s32.totalorder %s19, 1
    %p215 = por %p213, %p214
    %p216 = scmp.ne.s32.totalorder %s205, %s206
    %p217 = scmp.eq.s32.totalorder %s19, 0
    %p218 = por %p216, %p217
    %p219 = scmp.ne.s32.totalorder %s205, %s206
    %p220 = scmp.eq.s32.totalorder %s20, 1
    %p221 = por %p219, %p220
    %p223 = scmp.ne.s32.totalorder %s206, %s222
    %p224 = scmp.eq.s32.totalorder %s20, 0
    %p225 = por %p223, %p224
    %p226 = scmp.le.s32.totalorder 1, %s14
    %p227 = scmp.lt.s32.totalorder %s14, 3
    %p228 = pnand %p226, %p227
    %p229 = pneg %p228
    // Predicated region
    $region9: #{final_layer_forward.1} parent=5 // pred_check
      _
    $region10: #{final_layer_forward.1} parent=5 // pred_check_branch
      %231 = sbr.rel (%p228) target = $region12
    $region11: #{final_layer_forward.1} parent=5 // pred_region
      %s232 = ssub.s32 %s14, 1
      // Predicated region
      $region13: #{final_layer_forward.1} parent=11 // pred_check
        %p233 = pneg %p87
      $region14: #{final_layer_forward.1} parent=11 // pred_check_branch
        %235 = sbr.rel (%p233) target = $region16
      $region15: #{final_layer_forward.1} parent=11 // pred_region
        _
      $region16: #{final_layer_forward.1} parent=11 // pred_fallthru
        _
      // Predicated region
      $region17: #{final_layer_forward.1} parent=11 // pred_check
        %p236 = pneg %p108
      $region18: #{final_layer_forward.1} parent=11 // pred_check_branch
        %238 = sbr.rel (%p236) target = $region20
      $region19: #{final_layer_forward.1} parent=11 // pred_region
        _
      $region20: #{final_layer_forward.1} parent=11 // pred_fallthru
        _
      // Predicated region
      $region21: #{final_layer_forward.1} parent=11 // pred_check
        %p239 = pneg %p129
      $region22: #{final_layer_forward.1} parent=11 // pred_check_branch
        %241 = sbr.rel (%p239) target = $region24
      $region23: #{final_layer_forward.1} parent=11 // pred_region
        _
      $region24: #{final_layer_forward.1} parent=11 // pred_fallthru
        _
      // Predicated region
      $region25: #{final_layer_forward.1} parent=11 // pred_check
        %p242 = pneg %p150
      $region26: #{final_layer_forward.1} parent=11 // pred_check_branch
        %244 = sbr.rel (%p242) target = $region28
      $region27: #{final_layer_forward.1} parent=11 // pred_region
        _
      $region28: #{final_layer_forward.1} parent=11 // pred_fallthru
        _
      // Predicated region
      $region29: #{final_layer_forward.1} parent=11 // pred_check
        %p245 = pneg %p171
      $region30: #{final_layer_forward.1} parent=11 // pred_check_branch
        %247 = sbr.rel (%p245) target = $region32
      $region31: #{final_layer_forward.1} parent=11 // pred_region
        _
      $region32: #{final_layer_forward.1} parent=11 // pred_fallthru
        _
      // Predicated region
      $region33: #{final_layer_forward.1} parent=11 // pred_check
        %p248 = pneg %p192
      $region34: #{final_layer_forward.1} parent=11 // pred_check_branch
        %250 = sbr.rel (%p248) target = $region36
      $region35: #{final_layer_forward.1} parent=11 // pred_region
        _
      $region36: #{final_layer_forward.1} parent=11 // pred_fallthru
        _
    $region12: #{final_layer_forward.1} parent=5 // pred_fallthru
      _
    %p251 = scmp.lt.s32.totalorder %s14, 2
    // Predicated region
    $region37: #{final_layer_forward.1} parent=5 // pred_check
      %p252 = pneg %p251
    $region38: #{final_layer_forward.1} parent=5 // pred_check_branch
      %254 = sbr.rel (%p252) target = $region40
    $region39: #{final_layer_forward.1} parent=5 // pred_region
      // Predicated region
      $region41: #{final_layer_forward.1} parent=39 // pred_check
        %p255 = pneg %p34
      $region42: #{final_layer_forward.1} parent=39 // pred_check_branch
        %257 = sbr.rel (%p255) target = $region44
      $region43: #{final_layer_forward.1} parent=39 // pred_region
        %p258 = scmp.lt.s32.totalorder %s14, 1
        %s259 = scalar_select %p258, %s14, 1
        %s260 = smul.addr %s259, 32
        %s261 = smul.addr %s260, 8
        %s262 = scalar_lea.vmem %s0, %s261
      $region44: #{final_layer_forward.1} parent=39 // pred_fallthru
        _
      // Predicated region
      $region45: #{final_layer_forward.1} parent=39 // pred_check
        %p263 = pneg %p60
      $region46: #{final_layer_forward.1} parent=39 // pred_check_branch
        %265 = sbr.rel (%p263) target = $region48
      $region47: #{final_layer_forward.1} parent=39 // pred_region
        %p266 = scmp.lt.s32.totalorder %s14, 1
        %s267 = scalar_select %p266, %s14, 1
        %s268 = scalar_lea.vmem %s1, %s267
      $region48: #{final_layer_forward.1} parent=39 // pred_fallthru
        _
    $region40: #{final_layer_forward.1} parent=5 // pred_fallthru
      _
    %p269 = scmp.le.s32.totalorder 1, %s14
    %p270 = scmp.lt.s32.totalorder %s14, 3
    %p271 = pnand %p269, %p270
    %p272 = pneg %p271
    // Predicated region
    $region49: #{final_layer_forward.1} parent=5 // pred_check
      _
    $region50: #{final_layer_forward.1} parent=5 // pred_check_branch
      %274 = sbr.rel (%p271) target = $region52
    $region51: #{final_layer_forward.1} parent=5 // pred_region
      %s275 = ssub.s32 %s14, 1
      %p276 = scmp.lt.s32.totalorder %s19, 1
      %s277 = scalar_select %p276, %s19, 1
      %s278 = smul.addr %s277, 32
      %s279 = smul.addr %s278, 8
      %s280 = scalar_lea.vmem %s0, %s279
      %p281 = pneg %p40
      %p282 = pneg %p37
      %p283 = scmp.lt.s32.totalorder %s19, 1
      %s284 = scalar_select %p283, %s19, 1
      %s285 = scalar_lea.vmem %s1, %s284
      %p286 = pneg %p66
      %p287 = pneg %p63
      %p288 = pneg %p87
      %p289 = pneg %p84
      %p290 = pneg %p108
      %p291 = pneg %p105
      %p292 = pneg %p129
      %p293 = pneg %p126
      %p294 = pneg %p150
      %p295 = pneg %p147
      %p296 = pneg %p171
      %p297 = pneg %p168
      %p298 = pneg %p192
      %p299 = pneg %p189
      %p300 = pneg %p218
      %p301 = pneg %p215
      %p302 = scmp.lt.s32.totalorder %s19, 1
      %s303 = scalar_select %p302, %s19, 1
      %s304 = smul.addr %s303, 32
      %s305 = smul.addr %s304, 8
      %s306 = scalar_lea.vmem %s8, %s305
      %p307 = scmp.lt.s32.totalorder %s19, 1
      %s308 = scalar_select %p307, %s19, 1
      %s309 = smul.addr %s308, 32
      %s310 = smul.addr %s309, 8
      %s311 = scalar_lea.vmem %s0, %s310
      %p312 = scmp.lt.s32.totalorder %s19, 1
      %s313 = scalar_select %p312, %s19, 1
      %s314 = scalar_lea.vmem %s1, %s313
      %p315 = scmp.lt.s32.totalorder %s19, 1
      %s316 = scalar_select %p315, %s19, 1
      %s317 = smul.addr %s316, 32
      %s318 = smul.addr %s317, 8
      %s319 = scalar_lea.vmem %s8, %s318
      %v321 = vld [vmem:[%s314] sm:$0x1]
      %v322 = vxor.u32 %v321, 2147483648
      %v323 = vmul.f32 %v322, 1.442695
      %v324 = vpow.pop %v323
      %v325 = vadd.f32 %v324, 1.0
      %v326 = vrcp.pop %v325
      %v327 = vmul.f32 1.0, %v326
      %v328 = vmul.f32 %v321, %v327
      %v329 = vpack.c.bf16 %v328, %v328
      %v330 = vld [vmem:[%s2] sm:$0xf]
      %v331 = vld [vmem:[%s2 + $0x4] sm:$0xf]
      %v332 = vld [vmem:[%s2 + $0x8] sm:$0xf]
      %v333 = vld [vmem:[%s2 + $0xc] sm:$0xf]
      %v334 = vld [vmem:[%s2 + $0x10] sm:$0xf]
      %v335 = vld [vmem:[%s2 + $0x14] sm:$0xf]
      %v336 = vld [vmem:[%s2 + $0x18] sm:$0xf]
      %v337 = vld [vmem:[%s2 + $0x1c] sm:$0xf]
      %v338 = vld [vmem:[%s4] sm:$0x1]
      %v347 = vunpack.c.l.b16 %v330
      %v348 = vunpack.c.l.b16 %v331
      %v349 = vunpack.c.l.b16 %v332
      %v350 = vunpack.c.l.b16 %v333
      %v351 = vunpack.c.l.b16 %v334
      %v352 = vunpack.c.l.b16 %v335
      %v353 = vunpack.c.l.b16 %v336
      %v354 = vunpack.c.l.b16 %v337
      %v355 = vpack.c.b16 %v348, %v347
      %v356 = vpack.c.b16 %v350, %v349
      %v357 = vpack.c.b16 %v352, %v351
      %v358 = vpack.c.b16 %v354, %v353
      %vm363 = vcmask 523264
      %v365 = vsel %vm363, %v329, 0
      %367 = vmatprep.subr.bf16.mxu0 0
      %368 = vmatpush1.bf16.msra.mxu0 %v355
      %369 = vmatprep.subr.bf16.mxu0 0
      %370 = vmatpush1.bf16.msra.mxu0 %v356
      %371 = vmatprep.subr.bf16.mxu0 0
      %372 = vmatpush1.bf16.msra.mxu0 %v357
      %373 = vmatprep.subr.bf16.mxu0 0
      %374 = vmatpush1.bf16.msra.mxu0 %v358
      %375 = vmatprep.subr.bf16.mxu0 0
      %376 = vmatpush1.bf16.msra.mxu0 0
      %377 = vmatprep.subr.bf16.mxu0 0
      %378 = vmatpush1.bf16.msra.mxu0 0
      %379 = vmatprep.subr.bf16.mxu0 0
      %380 = vmatpush1.bf16.msra.mxu0 0
      %381 = vmatprep.subr.bf16.mxu0 0
      %382 = vmatpush1.bf16.msra.mxu0 0
      %383 = vmatprep.subr.bf16.mxu0 0
      %384 = vmatpush1.bf16.msra.mxu0 0
      %385 = vmatprep.subr.bf16.mxu0 0
      %386 = vmatpush1.bf16.msra.mxu0 0
      %387 = vmatprep.subr.bf16.mxu0 0
      %388 = vmatpush1.bf16.msra.mxu0 0
      %389 = vmatprep.subr.bf16.mxu0 0
      %390 = vmatpush1.bf16.msra.mxu0 0
      %391 = vmatprep.subr.bf16.mxu0 0
      %392 = vmatpush1.bf16.msra.mxu0 0
      %393 = vmatprep.subr.bf16.mxu0 0
      %394 = vmatpush1.bf16.msra.mxu0 0
      %395 = vmatprep.subr.bf16.mxu0 0
      %396 = vmatpush1.bf16.msra.mxu0 0
      %397 = vmatprep.subr.bf16.mxu0 0
      %398 = vmatpush1.bf16.msra.mxu0 0
      %399 = vmatprep.mubr.bf16.mxu0 0
      %400 = vmatmul.mubr.bf16.gmra.mrb[0].mxu0 %v365
      %v401 = vpop.f32.mrb[0].mxu0
      %v402 = vadd.f32 %v338, %v401
      %v403 = vpop.f32.mrb[0].mxu0
      %v404 = vpop.f32.mrb[0].mxu0
      %v405 = vpop.f32.mrb[0].mxu0
      %406 = vdwg.mxu0
      %v407 = vld [vmem:[%s3] sm:$0xf]
      %v408 = vld [vmem:[%s3 + $0x4] sm:$0xf]
      %v409 = vld [vmem:[%s3 + $0x8] sm:$0xf]
      %v410 = vld [vmem:[%s3 + $0xc] sm:$0xf]
      %v411 = vld [vmem:[%s3 + $0x10] sm:$0xf]
      %v412 = vld [vmem:[%s3 + $0x14] sm:$0xf]
      %v413 = vld [vmem:[%s3 + $0x18] sm:$0xf]
      %v414 = vld [vmem:[%s3 + $0x1c] sm:$0xf]
      %v415 = vld [vmem:[%s5] sm:$0x1]
      %v424 = vunpack.c.l.b16 %v407
      %v425 = vunpack.c.l.b16 %v408
      %v426 = vunpack.c.l.b16 %v409
      %v427 = vunpack.c.l.b16 %v410
      %v428 = vunpack.c.l.b16 %v411
      %v429 = vunpack.c.l.b16 %v412
      %v430 = vunpack.c.l.b16 %v413
      %v431 = vunpack.c.l.b16 %v414
      %v432 = vpack.c.b16 %v425, %v424
      %v433 = vpack.c.b16 %v427, %v426
      %v434 = vpack.c.b16 %v429, %v428
      %v435 = vpack.c.b16 %v431, %v430
      %440 = vmatprep.subr.bf16.mxu0 0
      %441 = vmatpush1.bf16.msra.mxu0 %v432
      %442 = vmatprep.subr.bf16.mxu0 0
      %443 = vmatpush1.bf16.msra.mxu0 %v433
      %444 = vmatprep.subr.bf16.mxu0 0
      %445 = vmatpush1.bf16.msra.mxu0 %v434
      %446 = vmatprep.subr.bf16.mxu0 0
      %447 = vmatpush1.bf16.msra.mxu0 %v435
      %448 = vmatprep.subr.bf16.mxu0 0
      %449 = vmatpush1.bf16.msra.mxu0 0
      %450 = vmatprep.subr.bf16.mxu0 0
      %451 = vmatpush1.bf16.msra.mxu0 0
      %452 = vmatprep.subr.bf16.mxu0 0
      %453 = vmatpush1.bf16.msra.mxu0 0
      %454 = vmatprep.subr.bf16.mxu0 0
      %455 = vmatpush1.bf16.msra.mxu0 0
      %456 = vmatprep.subr.bf16.mxu0 0
      %457 = vmatpush1.bf16.msra.mxu0 0
      %458 = vmatprep.subr.bf16.mxu0 0
      %459 = vmatpush1.bf16.msra.mxu0 0
      %460 = vmatprep.subr.bf16.mxu0 0
      %461 = vmatpush1.bf16.msra.mxu0 0
      %462 = vmatprep.subr.bf16.mxu0 0
      %463 = vmatpush1.bf16.msra.mxu0 0
      %464 = vmatprep.subr.bf16.mxu0 0
      %465 = vmatpush1.bf16.msra.mxu0 0
      %466 = vmatprep.subr.bf16.mxu0 0
      %467 = vmatpush1.bf16.msra.mxu0 0
      %468 = vmatprep.subr.bf16.mxu0 0
      %469 = vmatpush1.bf16.msra.mxu0 0
      %470 = vmatprep.subr.bf16.mxu0 0
      %471 = vmatpush1.bf16.msra.mxu0 0
      %472 = vmatprep.mubr.bf16.mxu0 0
      %473 = vmatmul.mubr.bf16.gmra.mrb[0].mxu0 %v365
      %v474 = vpop.f32.mrb[0].mxu0
      %v475 = vadd.f32 %v415, %v474
      %v476 = vpop.f32.mrb[0].mxu0
      %v477 = vpop.f32.mrb[0].mxu0
      %v478 = vpop.f32.mrb[0].mxu0
      %479 = vdwg.mxu0
      %v480 = vld [vmem:[%s311] sm:$0xff]
      %v481 = vld [vmem:[%s311 + $0x8] sm:$0xff]
      %v482 = vld [vmem:[%s311 + $0x10] sm:$0xff]
      %v483 = vld [vmem:[%s311 + $0x18] sm:$0xff]
      %v484 = vld [vmem:[%s311 + $0x20] sm:$0xff]
      %v485 = vld [vmem:[%s311 + $0x28] sm:$0xff]
      %v486 = vld [vmem:[%s311 + $0x30] sm:$0xff]
      %v487 = vld [vmem:[%s311 + $0x38] sm:$0xff]
      %v488 = vld [vmem:[%s311 + $0x40] sm:$0xff]
      %v489 = vld [vmem:[%s311 + $0x48] sm:$0xff]
      %v490 = vld [vmem:[%s311 + $0x50] sm:$0xff]
      %v491 = vld [vmem:[%s311 + $0x58] sm:$0xff]
      %v492 = vld [vmem:[%s311 + $0x60] sm:$0xff]
      %v493 = vld [vmem:[%s311 + $0x68] sm:$0xff]
      %v494 = vld [vmem:[%s311 + $0x70] sm:$0xff]
      %v495 = vld [vmem:[%s311 + $0x78] sm:$0xff]
      %v496 = vld [vmem:[%s311 + $0x80] sm:$0xff]
      %v497 = vld [vmem:[%s311 + $0x88] sm:$0xff]
      %v498 = vld [vmem:[%s311 + $0x90] sm:$0xff]
      %v499 = vld [vmem:[%s311 + $0x98] sm:$0xff]
      %v500 = vld [vmem:[%s311 + $0xa0] sm:$0xff]
      %v501 = vld [vmem:[%s311 + $0xa8] sm:$0xff]
      %v502 = vld [vmem:[%s311 + $0xb0] sm:$0xff]
      %v503 = vld [vmem:[%s311 + $0xb8] sm:$0xff]
      %v504 = vld [vmem:[%s311 + $0xc0] sm:$0xff]
      %v505 = vld [vmem:[%s311 + $0xc8] sm:$0xff]
      %v506 = vld [vmem:[%s311 + $0xd0] sm:$0xff]
      %v507 = vld [vmem:[%s311 + $0xd8] sm:$0xff]
      %v508 = vld [vmem:[%s311 + $0xe0] sm:$0xff]
      %v509 = vld [vmem:[%s311 + $0xe8] sm:$0xff]
      %v510 = vld [vmem:[%s311 + $0xf0] sm:$0xff]
      %v511 = vld [vmem:[%s311 + $0xf8] sm:$0xff]
      %v512 = vsel %vm363, %v480, 0.0
      %513 = vadd.xlane.f32.xlu0 %v512
      %v514 = vpop.xlane.xlu0 %513
      %v515 = vsel %vm363, %v481, 0.0
      %516 = vadd.xlane.f32.xlu0 %v515
      %v517 = vpop.xlane.xlu0 %516
      %v518 = vsel %vm363, %v482, 0.0
      %519 = vadd.xlane.f32.xlu0 %v518
      %v520 = vpop.xlane.xlu0 %519
      %v521 = vsel %vm363, %v483, 0.0
      %522 = vadd.xlane.f32.xlu0 %v521
      %v523 = vpop.xlane.xlu0 %522
      %v524 = vsel %vm363, %v484, 0.0
      %525 = vadd.xlane.f32.xlu0 %v524
      %v526 = vpop.xlane.xlu0 %525
      %v527 = vsel %vm363, %v485, 0.0
      %528 = vadd.xlane.f32.xlu0 %v527
      %v529 = vpop.xlane.xlu0 %528
      %v530 = vsel %vm363, %v486, 0.0
      %531 = vadd.xlane.f32.xlu0 %v530
      %v532 = vpop.xlane.xlu0 %531
      %v533 = vsel %vm363, %v487, 0.0
      %534 = vadd.xlane.f32.xlu0 %v533
      %v535 = vpop.xlane.xlu0 %534
      %v536 = vsel %vm363, %v488, 0.0
      %537 = vadd.xlane.f32.xlu0 %v536
      %v538 = vpop.xlane.xlu0 %537
      %v539 = vsel %vm363, %v489, 0.0
      %540 = vadd.xlane.f32.xlu0 %v539
      %v541 = vpop.xlane.xlu0 %540
      %v542 = vsel %vm363, %v490, 0.0
      %543 = vadd.xlane.f32.xlu0 %v542
      %v544 = vpop.xlane.xlu0 %543
      %v545 = vsel %vm363, %v491, 0.0
      %546 = vadd.xlane.f32.xlu0 %v545
      %v547 = vpop.xlane.xlu0 %546
      %v548 = vsel %vm363, %v492, 0.0
      %549 = vadd.xlane.f32.xlu0 %v548
      %v550 = vpop.xlane.xlu0 %549
      %v551 = vsel %vm363, %v493, 0.0
      %552 = vadd.xlane.f32.xlu0 %v551
      %v553 = vpop.xlane.xlu0 %552
      %v554 = vsel %vm363, %v494, 0.0
      %555 = vadd.xlane.f32.xlu0 %v554
      %v556 = vpop.xlane.xlu0 %555
      %v557 = vsel %vm363, %v495, 0.0
      %558 = vadd.xlane.f32.xlu0 %v557
      %v559 = vpop.xlane.xlu0 %558
      %v560 = vsel %vm363, %v496, 0.0
      %561 = vadd.xlane.f32.xlu0 %v560
      %v562 = vpop.xlane.xlu0 %561
      %v563 = vsel %vm363, %v497, 0.0
      %564 = vadd.xlane.f32.xlu0 %v563
      %v565 = vpop.xlane.xlu0 %564
      %v566 = vsel %vm363, %v498, 0.0
      %567 = vadd.xlane.f32.xlu0 %v566
      %v568 = vpop.xlane.xlu0 %567
      %v569 = vsel %vm363, %v499, 0.0
      %570 = vadd.xlane.f32.xlu0 %v569
      %v571 = vpop.xlane.xlu0 %570
      %v572 = vsel %vm363, %v500, 0.0
      %573 = vadd.xlane.f32.xlu0 %v572
      %v574 = vpop.xlane.xlu0 %573
      %v575 = vsel %vm363, %v501, 0.0
      %576 = vadd.xlane.f32.xlu0 %v575
      %v577 = vpop.xlane.xlu0 %576
      %v578 = vsel %vm363, %v502, 0.0
      %579 = vadd.xlane.f32.xlu0 %v578
      %v580 = vpop.xlane.xlu0 %579
      %v581 = vsel %vm363, %v503, 0.0
      %582 = vadd.xlane.f32.xlu0 %v581
      %v583 = vpop.xlane.xlu0 %582
      %v584 = vsel %vm363, %v504, 0.0
      %585 = vadd.xlane.f32.xlu0 %v584
      %v586 = vpop.xlane.xlu0 %585
      %v587 = vsel %vm363, %v505, 0.0
      %588 = vadd.xlane.f32.xlu0 %v587
      %v589 = vpop.xlane.xlu0 %588
      %v590 = vsel %vm363, %v506, 0.0
      %591 = vadd.xlane.f32.xlu0 %v590
      %v592 = vpop.xlane.xlu0 %591
      %v593 = vsel %vm363, %v507, 0.0
      %594 = vadd.xlane.f32.xlu0 %v593
      %v595 = vpop.xlane.xlu0 %594
      %v596 = vsel %vm363, %v508, 0.0
      %597 = vadd.xlane.f32.xlu0 %v596
      %v598 = vpop.xlane.xlu0 %597
      %v599 = vsel %vm363, %v509, 0.0
      %600 = vadd.xlane.f32.xlu0 %v599
      %v601 = vpop.xlane.xlu0 %600
      %v602 = vsel %vm363, %v510, 0.0
      %603 = vadd.xlane.f32.xlu0 %v602
      %v604 = vpop.xlane.xlu0 %603
      %v605 = vsel %vm363, %v511, 0.0
      %606 = vadd.xlane.f32.xlu0 %v605
      %v607 = vpop.xlane.xlu0 %606
      %v608 = vrcp.pop 64.0
      %v609 = vmul.f32 %v514, %v608
      %v610 = vmul.f32 %v517, %v608
      %v611 = vmul.f32 %v520, %v608
      %v612 = vmul.f32 %v523, %v608
      %v613 = vmul.f32 %v526, %v608
      %v614 = vmul.f32 %v529, %v608
      %v615 = vmul.f32 %v532, %v608
      %v616 = vmul.f32 %v535, %v608
      %v617 = vmul.f32 %v538, %v608
      %v618 = vmul.f32 %v541, %v608
      %v619 = vmul.f32 %v544, %v608
      %v620 = vmul.f32 %v547, %v608
      %v621 = vmul.f32 %v550, %v608
      %v622 = vmul.f32 %v553, %v608
      %v623 = vmul.f32 %v556, %v608
      %v624 = vmul.f32 %v559, %v608
      %v625 = vmul.f32 %v562, %v608
      %v626 = vmul.f32 %v565, %v608
      %v627 = vmul.f32 %v568, %v608
      %v628 = vmul.f32 %v571, %v608
      %v629 = vmul.f32 %v574, %v608
      %v630 = vmul.f32 %v577, %v608
      %v631 = vmul.f32 %v580, %v608
      %v632 = vmul.f32 %v583, %v608
      %v633 = vmul.f32 %v586, %v608
      %v634 = vmul.f32 %v589, %v608
      %v635 = vmul.f32 %v592, %v608
      %v636 = vmul.f32 %v595, %v608
      %v637 = vmul.f32 %v598, %v608
      %v638 = vmul.f32 %v601, %v608
      %v639 = vmul.f32 %v604, %v608
      %v640 = vmul.f32 %v607, %v608
      %v641 = vsub.f32 %v480, %v609
      %v642 = vsub.f32 %v481, %v610
      %v643 = vsub.f32 %v482, %v611
      %v644 = vsub.f32 %v483, %v612
      %v645 = vsub.f32 %v484, %v613
      %v646 = vsub.f32 %v485, %v614
      %v647 = vsub.f32 %v486, %v615
      %v648 = vsub.f32 %v487, %v616
      %v649 = vsub.f32 %v488, %v617
      %v650 = vsub.f32 %v489, %v618
      %v651 = vsub.f32 %v490, %v619
      %v652 = vsub.f32 %v491, %v620
      %v653 = vsub.f32 %v492, %v621
      %v654 = vsub.f32 %v493, %v622
      %v655 = vsub.f32 %v494, %v623
      %v656 = vsub.f32 %v495, %v624
      %v657 = vsub.f32 %v496, %v625
      %v658 = vsub.f32 %v497, %v626
      %v659 = vsub.f32 %v498, %v627
      %v660 = vsub.f32 %v499, %v628
      %v661 = vsub.f32 %v500, %v629
      %v662 = vsub.f32 %v501, %v630
      %v663 = vsub.f32 %v502, %v631
      %v664 = vsub.f32 %v503, %v632
      %v665 = vsub.f32 %v504, %v633
      %v666 = vsub.f32 %v505, %v634
      %v667 = vsub.f32 %v506, %v635
      %v668 = vsub.f32 %v507, %v636
      %v669 = vsub.f32 %v508, %v637
      %v670 = vsub.f32 %v509, %v638
      %v671 = vsub.f32 %v510, %v639
      %v672 = vsub.f32 %v511, %v640
      %v673 = vmul.f32 %v641, %v641
      %v674 = vmul.f32 %v642, %v642
      %v675 = vmul.f32 %v643, %v643
      %v676 = vmul.f32 %v644, %v644
      %v677 = vmul.f32 %v645, %v645
      %v678 = vmul.f32 %v646, %v646
      %v679 = vmul.f32 %v647, %v647
      %v680 = vmul.f32 %v648, %v648
      %v681 = vmul.f32 %v649, %v649
      %v682 = vmul.f32 %v650, %v650
      %v683 = vmul.f32 %v651, %v651
      %v684 = vmul.f32 %v652, %v652
      %v685 = vmul.f32 %v653, %v653
      %v686 = vmul.f32 %v654, %v654
      %v687 = vmul.f32 %v655, %v655
      %v688 = vmul.f32 %v656, %v656
      %v689 = vmul.f32 %v657, %v657
      %v690 = vmul.f32 %v658, %v658
      %v691 = vmul.f32 %v659, %v659
      %v692 = vmul.f32 %v660, %v660
      %v693 = vmul.f32 %v661, %v661
      %v694 = vmul.f32 %v662, %v662
      %v695 = vmul.f32 %v663, %v663
      %v696 = vmul.f32 %v664, %v664
      %v697 = vmul.f32 %v665, %v665
      %v698 = vmul.f32 %v666, %v666
      %v699 = vmul.f32 %v667, %v667
      %v700 = vmul.f32 %v668, %v668
      %v701 = vmul.f32 %v669, %v669
      %v702 = vmul.f32 %v670, %v670
      %v703 = vmul.f32 %v671, %v671
      %v704 = vmul.f32 %v672, %v672
      %v705 = vsel %vm363, %v673, 0.0
      %706 = vadd.xlane.f32.xlu0 %v705
      %v707 = vpop.xlane.xlu0 %706
      %v708 = vsel %vm363, %v674, 0.0
      %709 = vadd.xlane.f32.xlu0 %v708
      %v710 = vpop.xlane.xlu0 %709
      %v711 = vsel %vm363, %v675, 0.0
      %712 = vadd.xlane.f32.xlu0 %v711
      %v713 = vpop.xlane.xlu0 %712
      %v714 = vsel %vm363, %v676, 0.0
      %715 = vadd.xlane.f32.xlu0 %v714
      %v716 = vpop.xlane.xlu0 %715
      %v717 = vsel %vm363, %v677, 0.0
      %718 = vadd.xlane.f32.xlu0 %v717
      %v719 = vpop.xlane.xlu0 %718
      %v720 = vsel %vm363, %v678, 0.0
      %721 = vadd.xlane.f32.xlu0 %v720
      %v722 = vpop.xlane.xlu0 %721
      %v723 = vsel %vm363, %v679, 0.0
      %724 = vadd.xlane.f32.xlu0 %v723
      %v725 = vpop.xlane.xlu0 %724
      %v726 = vsel %vm363, %v680, 0.0
      %727 = vadd.xlane.f32.xlu0 %v726
      %v728 = vpop.xlane.xlu0 %727
      %v729 = vsel %vm363, %v681, 0.0
      %730 = vadd.xlane.f32.xlu0 %v729
      %v731 = vpop.xlane.xlu0 %730
      %v732 = vsel %vm363, %v682, 0.0
      %733 = vadd.xlane.f32.xlu0 %v732
      %v734 = vpop.xlane.xlu0 %733
      %v735 = vsel %vm363, %v683, 0.0
      %736 = vadd.xlane.f32.xlu0 %v735
      %v737 = vpop.xlane.xlu0 %736
      %v738 = vsel %vm363, %v684, 0.0
      %739 = vadd.xlane.f32.xlu0 %v738
      %v740 = vpop.xlane.xlu0 %739
      %v741 = vsel %vm363, %v685, 0.0
      %742 = vadd.xlane.f32.xlu0 %v741
      %v743 = vpop.xlane.xlu0 %742
      %v744 = vsel %vm363, %v686, 0.0
      %745 = vadd.xlane.f32.xlu0 %v744
      %v746 = vpop.xlane.xlu0 %745
      %v747 = vsel %vm363, %v687, 0.0
      %748 = vadd.xlane.f32.xlu0 %v747
      %v749 = vpop.xlane.xlu0 %748
      %v750 = vsel %vm363, %v688, 0.0
      %751 = vadd.xlane.f32.xlu0 %v750
      %v752 = vpop.xlane.xlu0 %751
      %v753 = vsel %vm363, %v689, 0.0
      %754 = vadd.xlane.f32.xlu0 %v753
      %v755 = vpop.xlane.xlu0 %754
      %v756 = vsel %vm363, %v690, 0.0
      %757 = vadd.xlane.f32.xlu0 %v756
      %v758 = vpop.xlane.xlu0 %757
      %v759 = vsel %vm363, %v691, 0.0
      %760 = vadd.xlane.f32.xlu0 %v759
      %v761 = vpop.xlane.xlu0 %760
      %v762 = vsel %vm363, %v692, 0.0
      %763 = vadd.xlane.f32.xlu0 %v762
      %v764 = vpop.xlane.xlu0 %763
      %v765 = vsel %vm363, %v693, 0.0
      %766 = vadd.xlane.f32.xlu0 %v765
      %v767 = vpop.xlane.xlu0 %766
      %v768 = vsel %vm363, %v694, 0.0
      %769 = vadd.xlane.f32.xlu0 %v768
      %v770 = vpop.xlane.xlu0 %769
      %v771 = vsel %vm363, %v695, 0.0
      %772 = vadd.xlane.f32.xlu0 %v771
      %v773 = vpop.xlane.xlu0 %772
      %v774 = vsel %vm363, %v696, 0.0
      %775 = vadd.xlane.f32.xlu0 %v774
      %v776 = vpop.xlane.xlu0 %775
      %v777 = vsel %vm363, %v697, 0.0
      %778 = vadd.xlane.f32.xlu0 %v777
      %v779 = vpop.xlane.xlu0 %778
      %v780 = vsel %vm363, %v698, 0.0
      %781 = vadd.xlane.f32.xlu0 %v780
      %v782 = vpop.xlane.xlu0 %781
      %v783 = vsel %vm363, %v699, 0.0
      %784 = vadd.xlane.f32.xlu0 %v783
      %v785 = vpop.xlane.xlu0 %784
      %v786 = vsel %vm363, %v700, 0.0
      %787 = vadd.xlane.f32.xlu0 %v786
      %v788 = vpop.xlane.xlu0 %787
      %v789 = vsel %vm363, %v701, 0.0
      %790 = vadd.xlane.f32.xlu0 %v789
      %v791 = vpop.xlane.xlu0 %790
      %v792 = vsel %vm363, %v702, 0.0
      %793 = vadd.xlane.f32.xlu0 %v792
      %v794 = vpop.xlane.xlu0 %793
      %v795 = vsel %vm363, %v703, 0.0
      %796 = vadd.xlane.f32.xlu0 %v795
      %v797 = vpop.xlane.xlu0 %796
      %v798 = vsel %vm363, %v704, 0.0
      %799 = vadd.xlane.f32.xlu0 %v798
      %v800 = vpop.xlane.xlu0 %799
      %v801 = vmul.f32 %v707, %v608
      %v802 = vmul.f32 %v710, %v608
      %v803 = vmul.f32 %v713, %v608
      %v804 = vmul.f32 %v716, %v608
      %v805 = vmul.f32 %v719, %v608
      %v806 = vmul.f32 %v722, %v608
      %v807 = vmul.f32 %v725, %v608
      %v808 = vmul.f32 %v728, %v608
      %v809 = vmul.f32 %v731, %v608
      %v810 = vmul.f32 %v734, %v608
      %v811 = vmul.f32 %v737, %v608
      %v812 = vmul.f32 %v740, %v608
      %v813 = vmul.f32 %v743, %v608
      %v814 = vmul.f32 %v746, %v608
      %v815 = vmul.f32 %v749, %v608
      %v816 = vmul.f32 %v752, %v608
      %v817 = vmul.f32 %v755, %v608
      %v818 = vmul.f32 %v758, %v608
      %v819 = vmul.f32 %v761, %v608
      %v820 = vmul.f32 %v764, %v608
      %v821 = vmul.f32 %v767, %v608
      %v822 = vmul.f32 %v770, %v608
      %v823 = vmul.f32 %v773, %v608
      %v824 = vmul.f32 %v776, %v608
      %v825 = vmul.f32 %v779, %v608
      %v826 = vmul.f32 %v782, %v608
      %v827 = vmul.f32 %v785, %v608
      %v828 = vmul.f32 %v788, %v608
      %v829 = vmul.f32 %v791, %v608
      %v830 = vmul.f32 %v794, %v608
      %v831 = vmul.f32 %v797, %v608
      %v832 = vmul.f32 %v800, %v608
      %v833 = vadd.f32 %v801, 1e-06
      %v834 = vadd.f32 %v802, 1e-06
      %v835 = vadd.f32 %v803, 1e-06
      %v836 = vadd.f32 %v804, 1e-06
      %v837 = vadd.f32 %v805, 1e-06
      %v838 = vadd.f32 %v806, 1e-06
      %v839 = vadd.f32 %v807, 1e-06
      %v840 = vadd.f32 %v808, 1e-06
      %v841 = vadd.f32 %v809, 1e-06
      %v842 = vadd.f32 %v810, 1e-06
      %v843 = vadd.f32 %v811, 1e-06
      %v844 = vadd.f32 %v812, 1e-06
      %v845 = vadd.f32 %v813, 1e-06
      %v846 = vadd.f32 %v814, 1e-06
      %v847 = vadd.f32 %v815, 1e-06
      %v848 = vadd.f32 %v816, 1e-06
      %v849 = vadd.f32 %v817, 1e-06
      %v850 = vadd.f32 %v818, 1e-06
      %v851 = vadd.f32 %v819, 1e-06
      %v852 = vadd.f32 %v820, 1e-06
      %v853 = vadd.f32 %v821, 1e-06
      %v854 = vadd.f32 %v822, 1e-06
      %v855 = vadd.f32 %v823, 1e-06
      %v856 = vadd.f32 %v824, 1e-06
      %v857 = vadd.f32 %v825, 1e-06
      %v858 = vadd.f32 %v826, 1e-06
      %v859 = vadd.f32 %v827, 1e-06
      %v860 = vadd.f32 %v828, 1e-06
      %v861 = vadd.f32 %v829, 1e-06
      %v862 = vadd.f32 %v830, 1e-06
      %v863 = vadd.f32 %v831, 1e-06
      %v864 = vadd.f32 %v832, 1e-06
      %v865 = vrsqrt.pop %v833
      %v866 = vrsqrt.pop %v834
      %v867 = vrsqrt.pop %v835
      %v868 = vrsqrt.pop %v836
      %v869 = vrsqrt.pop %v837
      %v870 = vrsqrt.pop %v838
      %v871 = vrsqrt.pop %v839
      %v872 = vrsqrt.pop %v840
      %v873 = vrsqrt.pop %v841
      %v874 = vrsqrt.pop %v842
      %v875 = vrsqrt.pop %v843
      %v876 = vrsqrt.pop %v844
      %v877 = vrsqrt.pop %v845
      %v878 = vrsqrt.pop %v846
      %v879 = vrsqrt.pop %v847
      %v880 = vrsqrt.pop %v848
      %v881 = vrsqrt.pop %v849
      %v882 = vrsqrt.pop %v850
      %v883 = vrsqrt.pop %v851
      %v884 = vrsqrt.pop %v852
      %v885 = vrsqrt.pop %v853
      %v886 = vrsqrt.pop %v854
      %v887 = vrsqrt.pop %v855
      %v888 = vrsqrt.pop %v856
      %v889 = vrsqrt.pop %v857
      %v890 = vrsqrt.pop %v858
      %v891 = vrsqrt.pop %v859
      %v892 = vrsqrt.pop %v860
      %v893 = vrsqrt.pop %v861
      %v894 = vrsqrt.pop %v862
      %v895 = vrsqrt.pop %v863
      %v896 = vrsqrt.pop %v864
      %v897 = vmul.f32 %v641, %v865
      %v898 = vmul.f32 %v642, %v866
      %v899 = vmul.f32 %v643, %v867
      %v900 = vmul.f32 %v644, %v868
      %v901 = vmul.f32 %v645, %v869
      %v902 = vmul.f32 %v646, %v870
      %v903 = vmul.f32 %v647, %v871
      %v904 = vmul.f32 %v648, %v872
      %v905 = vmul.f32 %v649, %v873
      %v906 = vmul.f32 %v650, %v874
      %v907 = vmul.f32 %v651, %v875
      %v908 = vmul.f32 %v652, %v876
      %v909 = vmul.f32 %v653, %v877
      %v910 = vmul.f32 %v654, %v878
      %v911 = vmul.f32 %v655, %v879
      %v912 = vmul.f32 %v656, %v880
      %v913 = vmul.f32 %v657, %v881
      %v914 = vmul.f32 %v658, %v882
      %v915 = vmul.f32 %v659, %v883
      %v916 = vmul.f32 %v660, %v884
      %v917 = vmul.f32 %v661, %v885
      %v918 = vmul.f32 %v662, %v886
      %v919 = vmul.f32 %v663, %v887
      %v920 = vmul.f32 %v664, %v888
      %v921 = vmul.f32 %v665, %v889
      %v922 = vmul.f32 %v666, %v890
      %v923 = vmul.f32 %v667, %v891
      %v924 = vmul.f32 %v668, %v892
      %v925 = vmul.f32 %v669, %v893
      %v926 = vmul.f32 %v670, %v894
      %v927 = vmul.f32 %v671, %v895
      %v928 = vmul.f32 %v672, %v896
      %v929 = vadd.f32 %v475, 1.0
      %v930 = vlaneseq
      %v931 = vshrl.u32 %v930, 7
      %v932 = vsub.s32 0, %v931
      %v933 = vrot.slane %v929, %v932
      %v934 = vmul.f32 %v897, %v933
      %v935 = vmul.f32 %v898, %v933
      %v936 = vmul.f32 %v899, %v933
      %v937 = vmul.f32 %v900, %v933
      %v938 = vmul.f32 %v901, %v933
      %v939 = vmul.f32 %v902, %v933
      %v940 = vmul.f32 %v903, %v933
      %v941 = vmul.f32 %v904, %v933
      %v942 = vmul.f32 %v905, %v933
      %v943 = vmul.f32 %v906, %v933
      %v944 = vmul.f32 %v907, %v933
      %v945 = vmul.f32 %v908, %v933
      %v946 = vmul.f32 %v909, %v933
      %v947 = vmul.f32 %v910, %v933
      %v948 = vmul.f32 %v911, %v933
      %v949 = vmul.f32 %v912, %v933
      %v950 = vmul.f32 %v913, %v933
      %v951 = vmul.f32 %v914, %v933
      %v952 = vmul.f32 %v915, %v933
      %v953 = vmul.f32 %v916, %v933
      %v954 = vmul.f32 %v917, %v933
      %v955 = vmul.f32 %v918, %v933
      %v956 = vmul.f32 %v919, %v933
      %v957 = vmul.f32 %v920, %v933
      %v958 = vmul.f32 %v921, %v933
      %v959 = vmul.f32 %v922, %v933
      %v960 = vmul.f32 %v923, %v933
      %v961 = vmul.f32 %v924, %v933
      %v962 = vmul.f32 %v925, %v933
      %v963 = vmul.f32 %v926, %v933
      %v964 = vmul.f32 %v927, %v933
      %v965 = vmul.f32 %v928, %v933
      %v966 = vlaneseq
      %v967 = vshrl.u32 %v966, 7
      %v968 = vsub.s32 0, %v967
      %v969 = vrot.slane %v402, %v968
      %v970 = vadd.f32 %v934, %v969
      %v971 = vadd.f32 %v935, %v969
      %v972 = vadd.f32 %v936, %v969
      %v973 = vadd.f32 %v937, %v969
      %v974 = vadd.f32 %v938, %v969
      %v975 = vadd.f32 %v939, %v969
      %v976 = vadd.f32 %v940, %v969
      %v977 = vadd.f32 %v941, %v969
      %v978 = vadd.f32 %v942, %v969
      %v979 = vadd.f32 %v943, %v969
      %v980 = vadd.f32 %v944, %v969
      %v981 = vadd.f32 %v945, %v969
      %v982 = vadd.f32 %v946, %v969
      %v983 = vadd.f32 %v947, %v969
      %v984 = vadd.f32 %v948, %v969
      %v985 = vadd.f32 %v949, %v969
      %v986 = vadd.f32 %v950, %v969
      %v987 = vadd.f32 %v951, %v969
      %v988 = vadd.f32 %v952, %v969
      %v989 = vadd.f32 %v953, %v969
      %v990 = vadd.f32 %v954, %v969
      %v991 = vadd.f32 %v955, %v969
      %v992 = vadd.f32 %v956, %v969
      %v993 = vadd.f32 %v957, %v969
      %v994 = vadd.f32 %v958, %v969
      %v995 = vadd.f32 %v959, %v969
      %v996 = vadd.f32 %v960, %v969
      %v997 = vadd.f32 %v961, %v969
      %v998 = vadd.f32 %v962, %v969
      %v999 = vadd.f32 %v963, %v969
      %v1000 = vadd.f32 %v964, %v969
      %v1001 = vadd.f32 %v965, %v969
      %v1002 = vpack.c.bf16 %v971, %v970
      %v1003 = vpack.c.bf16 %v973, %v972
      %v1004 = vpack.c.bf16 %v975, %v974
      %v1005 = vpack.c.bf16 %v977, %v976
      %v1006 = vpack.c.bf16 %v979, %v978
      %v1007 = vpack.c.bf16 %v981, %v980
      %v1008 = vpack.c.bf16 %v983, %v982
      %v1009 = vpack.c.bf16 %v985, %v984
      %v1010 = vpack.c.bf16 %v987, %v986
      %v1011 = vpack.c.bf16 %v989, %v988
      %v1012 = vpack.c.bf16 %v991, %v990
      %v1013 = vpack.c.bf16 %v993, %v992
      %v1014 = vpack.c.bf16 %v995, %v994
      %v1015 = vpack.c.bf16 %v997, %v996
      %v1016 = vpack.c.bf16 %v999, %v998
      %v1017 = vpack.c.bf16 %v1001, %v1000
      %v1018 = vld [vmem:[%s6] sm:$0xf]
      %v1019 = vld [vmem:[%s6 + $0x4] sm:$0xf]
      %v1020 = vld [vmem:[%s6 + $0x8] sm:$0xf]
      %v1021 = vld [vmem:[%s6 + $0xc] sm:$0xf]
      %v1022 = vld [vmem:[%s6 + $0x10] sm:$0xf]
      %v1023 = vld [vmem:[%s6 + $0x14] sm:$0xf]
      %v1024 = vld [vmem:[%s6 + $0x18] sm:$0xf]
      %v1025 = vld [vmem:[%s6 + $0x1c] sm:$0xf]
      %v1026 = vld [vmem:[%s7] sm:$0x1]
      %v1028 = vlaneseq
      %v1029 = vshrl.u32 %v1028, 7
      %v1030 = vsub.s32 0, %v1029
      %v1031 = vrot.slane %v1026, %v1030
      %v1041 = vunpack.c.l.b16 %v1018
      %v1042 = vunpack.c.l.b16 %v1019
      %v1043 = vunpack.c.l.b16 %v1020
      %v1044 = vunpack.c.l.b16 %v1021
      %v1045 = vunpack.c.l.b16 %v1022
      %v1046 = vunpack.c.l.b16 %v1023
      %v1047 = vunpack.c.l.b16 %v1024
      %v1048 = vunpack.c.l.b16 %v1025
      %v1049 = vpack.c.b16 %v1042, %v1041
      %v1050 = vpack.c.b16 %v1044, %v1043
      %v1051 = vpack.c.b16 %v1046, %v1045
      %v1052 = vpack.c.b16 %v1048, %v1047
      %v1058 = vsel %vm363, %v1002, 0
      %v1061 = vsel %vm363, %v1003, 0
      %v1064 = vsel %vm363, %v1004, 0
      %v1067 = vsel %vm363, %v1005, 0
      %v1070 = vsel %vm363, %v1006, 0
      %v1073 = vsel %vm363, %v1007, 0
      %v1076 = vsel %vm363, %v1008, 0
      %v1079 = vsel %vm363, %v1009, 0
      %v1082 = vsel %vm363, %v1010, 0
      %v1085 = vsel %vm363, %v1011, 0
      %v1088 = vsel %vm363, %v1012, 0
      %v1091 = vsel %vm363, %v1013, 0
      %v1094 = vsel %vm363, %v1014, 0
      %v1097 = vsel %vm363, %v1015, 0
      %v1100 = vsel %vm363, %v1016, 0
      %v1103 = vsel %vm363, %v1017, 0
      %1105 = vmatprep.subr.bf16.mxu0 0
      %1106 = vmatpush1.bf16.msra.mxu0 %v1049
      %1107 = vmatprep.subr.bf16.mxu0 0
      %1108 = vmatpush1.bf16.msra.mxu0 %v1050
      %1109 = vmatprep.subr.bf16.mxu0 0
      %1110 = vmatpush1.bf16.msra.mxu0 %v1051
      %1111 = vmatprep.subr.bf16.mxu0 0
      %1112 = vmatpush1.bf16.msra.mxu0 %v1052
      %1113 = vmatprep.subr.bf16.mxu0 0
      %1114 = vmatpush1.bf16.msra.mxu0 0
      %1115 = vmatprep.subr.bf16.mxu0 0
      %1116 = vmatpush1.bf16.msra.mxu0 0
      %1117 = vmatprep.subr.bf16.mxu0 0
      %1118 = vmatpush1.bf16.msra.mxu0 0
      %1119 = vmatprep.subr.bf16.mxu0 0
      %1120 = vmatpush1.bf16.msra.mxu0 0
      %1121 = vmatprep.subr.bf16.mxu0 0
      %1122 = vmatpush1.bf16.msra.mxu0 0
      %1123 = vmatprep.subr.bf16.mxu0 0
      %1124 = vmatpush1.bf16.msra.mxu0 0
      %1125 = vmatprep.subr.bf16.mxu0 0
      %1126 = vmatpush1.bf16.msra.mxu0 0
      %1127 = vmatprep.subr.bf16.mxu0 0
      %1128 = vmatpush1.bf16.msra.mxu0 0
      %1129 = vmatprep.subr.bf16.mxu0 0
      %1130 = vmatpush1.bf16.msra.mxu0 0
      %1131 = vmatprep.subr.bf16.mxu0 0
      %1132 = vmatpush1.bf16.msra.mxu0 0
      %1133 = vmatprep.subr.bf16.mxu0 0
      %1134 = vmatpush1.bf16.msra.mxu0 0
      %1135 = vmatprep.subr.bf16.mxu0 0
      %1136 = vmatpush1.bf16.msra.mxu0 0
      %1137 = vmatprep.mubr.bf16.mxu0 0
      %1138 = vmatmul.mubr.bf16.gmra.mrb[0].mxu0 %v1058
      %v1139 = vpop.f32.mrb[0].mxu0
      %v1140 = vadd.f32 %v1031, %v1139
      %v1141 = vpop.f32.mrb[0].mxu0
      %v1142 = vpop.f32.mrb[0].mxu0
      %v1143 = vadd.f32 %v1031, %v1142
      %v1144 = vpop.f32.mrb[0].mxu0
      %1145 = vmatprep.mubr.bf16.mxu0 0
      %1146 = vmatmul.mubr.bf16.gmra.mrb[0].mxu0 %v1061
      %v1147 = vpop.f32.mrb[0].mxu0
      %v1148 = vadd.f32 %v1031, %v1147
      %v1149 = vpop.f32.mrb[0].mxu0
      %v1150 = vpop.f32.mrb[0].mxu0
      %v1151 = vadd.f32 %v1031, %v1150
      %v1152 = vpop.f32.mrb[0].mxu0
      %1153 = vmatprep.mubr.bf16.mxu0 0
      %1154 = vmatmul.mubr.bf16.gmra.mrb[0].mxu0 %v1064
      %v1155 = vpop.f32.mrb[0].mxu0
      %v1156 = vadd.f32 %v1031, %v1155
      %v1157 = vpop.f32.mrb[0].mxu0
      %v1158 = vpop.f32.mrb[0].mxu0
      %v1159 = vadd.f32 %v1031, %v1158
      %v1160 = vpop.f32.mrb[0].mxu0
      %1161 = vmatprep.mubr.bf16.mxu0 0
      %1162 = vmatmul.mubr.bf16.gmra.mrb[0].mxu0 %v1067
      %v1163 = vpop.f32.mrb[0].mxu0
      %v1164 = vadd.f32 %v1031, %v1163
      %v1165 = vpop.f32.mrb[0].mxu0
      %v1166 = vpop.f32.mrb[0].mxu0
      %v1167 = vadd.f32 %v1031, %v1166
      %v1168 = vpop.f32.mrb[0].mxu0
      %1169 = vmatprep.mubr.bf16.mxu0 0
      %1170 = vmatmul.mubr.bf16.gmra.mrb[0].mxu0 %v1070
      %v1171 = vpop.f32.mrb[0].mxu0
      %v1172 = vadd.f32 %v1031, %v1171
      %v1173 = vpop.f32.mrb[0].mxu0
      %v1174 = vpop.f32.mrb[0].mxu0
      %v1175 = vadd.f32 %v1031, %v1174
      %v1176 = vpop.f32.mrb[0].mxu0
      %1177 = vmatprep.mubr.bf16.mxu0 0
      %1178 = vmatmul.mubr.bf16.gmra.mrb[0].mxu0 %v1073
      %v1179 = vpop.f32.mrb[0].mxu0
      %v1180 = vadd.f32 %v1031, %v1179
      %v1181 = vpop.f32.mrb[0].mxu0
      %v1182 = vpop.f32.mrb[0].mxu0
      %v1183 = vadd.f32 %v1031, %v1182
      %v1184 = vpop.f32.mrb[0].mxu0
      %1185 = vmatprep.mubr.bf16.mxu0 0
      %1186 = vmatmul.mubr.bf16.gmra.mrb[0].mxu0 %v1076
      %v1187 = vpop.f32.mrb[0].mxu0
      %v1188 = vadd.f32 %v1031, %v1187
      %v1189 = vpop.f32.mrb[0].mxu0
      %v1190 = vpop.f32.mrb[0].mxu0
      %v1191 = vadd.f32 %v1031, %v1190
      %v1192 = vpop.f32.mrb[0].mxu0
      %1193 = vmatprep.mubr.bf16.mxu0 0
      %1194 = vmatmul.mubr.bf16.gmra.mrb[0].mxu0 %v1079
      %v1195 = vpop.f32.mrb[0].mxu0
      %v1196 = vadd.f32 %v1031, %v1195
      %v1197 = vpop.f32.mrb[0].mxu0
      %v1198 = vpop.f32.mrb[0].mxu0
      %v1199 = vadd.f32 %v1031, %v1198
      %v1200 = vpop.f32.mrb[0].mxu0
      %1201 = vmatprep.mubr.bf16.mxu0 0
      %1202 = vmatmul.mubr.bf16.gmra.mrb[0].mxu0 %v1082
      %v1203 = vpop.f32.mrb[0].mxu0
      %v1204 = vadd.f32 %v1031, %v1203
      %v1205 = vpop.f32.mrb[0].mxu0
      %v1206 = vpop.f32.mrb[0].mxu0
      %v1207 = vadd.f32 %v1031, %v1206
      %v1208 = vpop.f32.mrb[0].mxu0
      %1209 = vmatprep.mubr.bf16.mxu0 0
      %1210 = vmatmul.mubr.bf16.gmra.mrb[0].mxu0 %v1085
      %v1211 = vpop.f32.mrb[0].mxu0
      %v1212 = vadd.f32 %v1031, %v1211
      %v1213 = vpop.f32.mrb[0].mxu0
      %v1214 = vpop.f32.mrb[0].mxu0
      %v1215 = vadd.f32 %v1031, %v1214
      %v1216 = vpop.f32.mrb[0].mxu0
      %1217 = vmatprep.mubr.bf16.mxu0 0
      %1218 = vmatmul.mubr.bf16.gmra.mrb[0].mxu0 %v1088
      %v1219 = vpop.f32.mrb[0].mxu0
      %v1220 = vadd.f32 %v1031, %v1219
      %v1221 = vpop.f32.mrb[0].mxu0
      %v1222 = vpop.f32.mrb[0].mxu0
      %v1223 = vadd.f32 %v1031, %v1222
      %v1224 = vpop.f32.mrb[0].mxu0
      %1225 = vmatprep.mubr.bf16.mxu0 0
      %1226 = vmatmul.mubr.bf16.gmra.mrb[0].mxu0 %v1091
      %v1227 = vpop.f32.mrb[0].mxu0
      %v1228 = vadd.f32 %v1031, %v1227
      %v1229 = vpop.f32.mrb[0].mxu0
      %v1230 = vpop.f32.mrb[0].mxu0
      %v1231 = vadd.f32 %v1031, %v1230
      %v1232 = vpop.f32.mrb[0].mxu0
      %1233 = vmatprep.mubr.bf16.mxu0 0
      %1234 = vmatmul.mubr.bf16.gmra.mrb[0].mxu0 %v1094
      %v1235 = vpop.f32.mrb[0].mxu0
      %v1236 = vadd.f32 %v1031, %v1235
      %v1237 = vpop.f32.mrb[0].mxu0
      %v1238 = vpop.f32.mrb[0].mxu0
      %v1239 = vadd.f32 %v1031, %v1238
      %v1240 = vpop.f32.mrb[0].mxu0
      %1241 = vmatprep.mubr.bf16.mxu0 0
      %1242 = vmatmul.mubr.bf16.gmra.mrb[0].mxu0 %v1097
      %v1243 = vpop.f32.mrb[0].mxu0
      %v1244 = vadd.f32 %v1031, %v1243
      %v1245 = vpop.f32.mrb[0].mxu0
      %v1246 = vpop.f32.mrb[0].mxu0
      %v1247 = vadd.f32 %v1031, %v1246
      %v1248 = vpop.f32.mrb[0].mxu0
      %1249 = vmatprep.mubr.bf16.mxu0 0
      %1250 = vmatmul.mubr.bf16.gmra.mrb[0].mxu0 %v1100
      %v1251 = vpop.f32.mrb[0].mxu0
      %v1252 = vadd.f32 %v1031, %v1251
      %v1253 = vpop.f32.mrb[0].mxu0
      %v1254 = vpop.f32.mrb[0].mxu0
      %v1255 = vadd.f32 %v1031, %v1254
      %v1256 = vpop.f32.mrb[0].mxu0
      %1257 = vmatprep.mubr.bf16.mxu0 0
      %1258 = vmatmul.mubr.bf16.gmra.mrb[0].mxu0 %v1103
      %v1259 = vpop.f32.mrb[0].mxu0
      %v1260 = vadd.f32 %v1031, %v1259
      %v1261 = vpop.f32.mrb[0].mxu0
      %v1262 = vpop.f32.mrb[0].mxu0
      %v1263 = vadd.f32 %v1031, %v1262
      %v1264 = vpop.f32.mrb[0].mxu0
      %1265 = vdwg.mxu0
      %1266 = vst [vmem:[%s319] sm:$0xff] %v1140
      %1267 = vst [vmem:[%s319 + $0x8] sm:$0xff] %v1143
      %1268 = vst [vmem:[%s319 + $0x10] sm:$0xff] %v1148
      %1269 = vst [vmem:[%s319 + $0x18] sm:$0xff] %v1151
      %1270 = vst [vmem:[%s319 + $0x20] sm:$0xff] %v1156
      %1271 = vst [vmem:[%s319 + $0x28] sm:$0xff] %v1159
      %1272 = vst [vmem:[%s319 + $0x30] sm:$0xff] %v1164
      %1273 = vst [vmem:[%s319 + $0x38] sm:$0xff] %v1167
      %1274 = vst [vmem:[%s319 + $0x40] sm:$0xff] %v1172
      %1275 = vst [vmem:[%s319 + $0x48] sm:$0xff] %v1175
      %1276 = vst [vmem:[%s319 + $0x50] sm:$0xff] %v1180
      %1277 = vst [vmem:[%s319 + $0x58] sm:$0xff] %v1183
      %1278 = vst [vmem:[%s319 + $0x60] sm:$0xff] %v1188
      %1279 = vst [vmem:[%s319 + $0x68] sm:$0xff] %v1191
      %1280 = vst [vmem:[%s319 + $0x70] sm:$0xff] %v1196
      %1281 = vst [vmem:[%s319 + $0x78] sm:$0xff] %v1199
      %1282 = vst [vmem:[%s319 + $0x80] sm:$0xff] %v1204
      %1283 = vst [vmem:[%s319 + $0x88] sm:$0xff] %v1207
      %1284 = vst [vmem:[%s319 + $0x90] sm:$0xff] %v1212
      %1285 = vst [vmem:[%s319 + $0x98] sm:$0xff] %v1215
      %1286 = vst [vmem:[%s319 + $0xa0] sm:$0xff] %v1220
      %1287 = vst [vmem:[%s319 + $0xa8] sm:$0xff] %v1223
      %1288 = vst [vmem:[%s319 + $0xb0] sm:$0xff] %v1228
      %1289 = vst [vmem:[%s319 + $0xb8] sm:$0xff] %v1231
      %1290 = vst [vmem:[%s319 + $0xc0] sm:$0xff] %v1236
      %1291 = vst [vmem:[%s319 + $0xc8] sm:$0xff] %v1239
      %1292 = vst [vmem:[%s319 + $0xd0] sm:$0xff] %v1244
      %1293 = vst [vmem:[%s319 + $0xd8] sm:$0xff] %v1247
      %1294 = vst [vmem:[%s319 + $0xe0] sm:$0xff] %v1252
      %1295 = vst [vmem:[%s319 + $0xe8] sm:$0xff] %v1255
      %1296 = vst [vmem:[%s319 + $0xf0] sm:$0xff] %v1260
      %1297 = vst [vmem:[%s319 + $0xf8] sm:$0xff] %v1263
      %p1298 = scmp.lt.s32.totalorder %s19, 1
      %s1299 = scalar_select %p1298, %s19, 1
      %s1300 = smul.addr %s1299, 32
      %s1301 = smul.addr %s1300, 8
      %s1302 = scalar_lea.vmem %s8, %s1301
      // Predicated region
      $region53: #{final_layer_forward.1} parent=51 // pred_check
        %p1303 = pneg %p215
      $region54: #{final_layer_forward.1} parent=51 // pred_check_branch
        %1305 = sbr.rel (%p1303) target = $region56
      $region55: #{final_layer_forward.1} parent=51 // pred_region
        _
      $region56: #{final_layer_forward.1} parent=51 // pred_fallthru
        _
    $region52: #{final_layer_forward.1} parent=5 // pred_fallthru
      _
    %p1306 = scmp.le.s32.totalorder 2, %s14
    // Predicated region
    $region57: #{final_layer_forward.1} parent=5 // pred_check
      %p1307 = pneg %p1306
    $region58: #{final_layer_forward.1} parent=5 // pred_check_branch
      %1309 = sbr.rel (%p1307) target = $region60
    $region59: #{final_layer_forward.1} parent=5 // pred_region
      %s1310 = ssub.s32 %s14, 2
      // Predicated region
      $region61: #{final_layer_forward.1} parent=59 // pred_check
        %p1311 = pneg %p221
      $region62: #{final_layer_forward.1} parent=59 // pred_check_branch
        %1313 = sbr.rel (%p1311) target = $region64
      $region63: #{final_layer_forward.1} parent=59 // pred_region
        %p1314 = scmp.lt.s32.totalorder %s20, 1
        %s1315 = scalar_select %p1314, %s20, 1
        %s1316 = smul.addr %s1315, 32
        %s1317 = smul.addr %s1316, 8
        %s1318 = scalar_lea.vmem %s8, %s1317
      $region64: #{final_layer_forward.1} parent=59 // pred_fallthru
        _
    $region60: #{final_layer_forward.1} parent=5 // pred_fallthru
      _
  $region6: #{final_layer_forward.1} parent=0 // loop_footer
    %s18 = sadd.s32 1, %s14
  $region7: #{final_layer_forward.1} parent=0 // loop_footer_branch
    %13 = sbr.rel target = $region3
  $region8: #{final_layer_forward.1} parent=0 // loop_exit
    _

</llo_original>
